<compile_context>
chip_gen: v7x
topology: tpu7x:2x2x1
jax: 0.10.0
libtpu: 0.0.40
codegen_flags: <defaults>
</compile_context>

<pallas_src>
import jax
import jax.numpy as jnp
from jax import lax
from jax.experimental import pallas as pl
from jax.experimental.pallas import tpu as pltpu


def _round_up(x, m):
    return (x + m - 1) // m * m


def _conv_matmul_kernel(z_ref, w_ref, b_ref, o_ref):
    # z_ref: (K, TM)      compute_dtype  im2col input tile (K = 9*Cin)
    # w_ref: (TCout, K)   compute_dtype  weight tile (resident across M sweep)
    # b_ref: (TCout, 1)   f32            bias tile
    # o_ref: (TCout, TM)  out dtype
    acc = jnp.dot(w_ref[...], z_ref[...], preferred_element_type=jnp.float32)
    o_ref[...] = (acc + b_ref[...]).astype(o_ref.dtype)


def downsample_pallas(x, weight, bias, *, compute_dtype=jnp.bfloat16):
    """Conv2d(in_ch, out_ch, kernel_size=3, stride=2, padding=1).

    x      : (N, Cin, H, W)       (NCHW, PyTorch layout)
    weight : (Cout, Cin, 3, 3)    (OIHW, PyTorch layout)
    bias   : (Cout,)
    returns: (N, Cout, Hout, Wout), Hout = floor((H + 2 - 3)/2) + 1
    """
    N, Cin, H, W = x.shape
    Cout = weight.shape[0]
    Hout = (H - 1) // 2 + 1
    Wout = (W - 1) // 2 + 1
    K = 9 * Cin
    M = Hout * Wout

    # ---- wrapper-side im2col (stride 2 => only ~2.25x the input elements) --
    # xp[n, ci, 1+h, 1+w] = x[n, ci, h, w]; extent (2*Hout + 1, 2*Wout + 1)
    # covers every tap of every stride-2 window (same zero-padding semantics
    # as PyTorch's padding=1).
    xp = jnp.pad(x, ((0, 0), (0, 0), (1, 2 * Hout - H), (1, 2 * Wout - W)))
    taps = [
        xp[:, :, kh:kh + 2 * Hout:2, kw:kw + 2 * Wout:2]     # (N, Cin, Hout, Wout)
        for kh in range(3) for kw in range(3)
    ]
    # Channel order: (kh*3 + kw)*Cin + ci  (tap-major), flattened spatial M.
    z9 = jnp.concatenate(taps, axis=1).reshape(N, K, M)

    # ---- tile sizes (budget each streamed block so the double-buffered
    # working set fits every generation's VMEM) ------------------------------
    blk_budget = 4 * 1024 * 1024
    cbytes = jnp.dtype(compute_dtype).itemsize

    M_pad = _round_up(M, 128)
    TM = 128
    for t in (1024, 512, 384, 256, 128):
        if M_pad % t == 0 and K * t * cbytes <= blk_budget:
            TM = t
            break

    Cout8 = _round_up(Cout, 8)
    TCout = None
    for t in (512, 256, 128):
        if Cout8 % t == 0 and t * K * cbytes <= blk_budget:
            TCout = t
            break
    if TCout is None:
        small = Cout8 <= 512 and Cout8 * K * cbytes <= blk_budget
        TCout = Cout8 if small else 128
    Cout_pad = _round_up(Cout8, TCout)

    # ---- operand layout / padding / dtype ----------------------------------
    z9 = jnp.pad(z9, ((0, 0), (0, 0), (0, M_pad - M))).astype(compute_dtype)

    # OIHW -> (Cout, kh, kw, Cin) -> (Cout, 9*Cin), matching z9 channel order.
    w9 = jnp.transpose(weight, (0, 2, 3, 1)).reshape(Cout, K)
    w9 = jnp.pad(w9, ((0, Cout_pad - Cout), (0, 0))).astype(compute_dtype)
    b2 = jnp.pad(bias, (0, Cout_pad - Cout)).reshape(Cout_pad, 1).astype(jnp.float32)

    grid = (N, Cout_pad // TCout, M_pad // TM)

    out = pl.pallas_call(
        _conv_matmul_kernel,
        out_shape=jax.ShapeDtypeStruct((N, Cout_pad, M_pad), x.dtype),
        grid_spec=pltpu.PrefetchScalarGridSpec(
            num_scalar_prefetch=0,
            grid=grid,
            in_specs=[
                # Input tile changes every (innermost) M step -> pipelined.
                pl.BlockSpec((None, K, TM), lambda n, c, m: (n, 0, m)),
                # Weight/bias blocks depend only on the Cout-tile axis ->
                # resident (DMA skipped) across the whole inner M sweep.
                pl.BlockSpec((TCout, K), lambda n, c, m: (c, 0)),
                pl.BlockSpec((TCout, 1), lambda n, c, m: (c, 0)),
            ],
            out_specs=pl.BlockSpec((None, TCout, TM), lambda n, c, m: (n, c, m)),
        ),
        compiler_params=pltpu.CompilerParams(
            # Every output block is written exactly once -> fully parallel
            # grid; v7x's 2 TensorCores get work even at N=1.
            dimension_semantics=("parallel", "parallel", "parallel"),
            vmem_limit_bytes=48 * 1024 * 1024,
        ),
    )(z9, w9, b2)

    # Drop channel / lane padding and restore NCHW spatial layout.
    return out[:, :Cout, :M].reshape(N, Cout, Hout, Wout)


def _reference_conv(x_nchw, weight, bias):
    y = lax.conv_general_dilated(
        x_nchw,
        weight,
        window_strides=(2, 2),
        padding=((1, 1), (1, 1)),
        dimension_numbers=("NCHW", "OIHW", "NCHW"),
    )
    return y + bias.reshape(1, -1, 1, 1)


if __name__ == "__main__":
    key = jax.random.PRNGKey(0)
    k_x, k_w, k_b = jax.random.split(key, 3)

    N, Cin, H, W = 2, 4, 16, 16
    Cout = 8

    x = jax.random.normal(k_x, (N, Cin, H, W), dtype=jnp.float32)
    # Deterministic synthetic params (PyTorch-like uniform init range).
    fan_in = Cin * 3 * 3
    bound = 1.0 / (fan_in ** 0.5)
    weight = jax.random.uniform(
        k_w, (Cout, Cin, 3, 3), minval=-bound, maxval=bound, dtype=jnp.float32
    )
    bias = jax.random.uniform(
        k_b, (Cout,), minval=-bound, maxval=bound, dtype=jnp.float32
    )

    out = jax.block_until_ready(downsample_pallas(x, weight, bias))
    ref = jax.block_until_ready(_reference_conv(x, weight, bias))

    assert out.shape == ref.shape == (N, Cout, H // 2, W // 2)
    # bf16 MXU operands with f32 accumulation: compare with a loose tolerance.
    err = float(jnp.max(jnp.abs(out - ref)))
    assert jnp.allclose(out, ref, atol=3e-2, rtol=3e-2), err

    print("KERNEL_OK")
</pallas_src>

<mosaic_0001>
module attributes {stable_mosaic.version = 11 : i64} {
  func.func @_conv_matmul_kernel(%arg0: i32, %arg1: i32, %arg2: i32, %arg3: memref<1x36x128xbf16, #tpu.memory_space<vmem>>, %arg4: memref<8x36xbf16, #tpu.memory_space<vmem>>, %arg5: memref<8x1xf32, #tpu.memory_space<vmem>>, %arg6: memref<1x8x128xf32, #tpu.memory_space<vmem>>) attributes {dimension_semantics = [#tpu.dimension_semantics<parallel>, #tpu.dimension_semantics<parallel>, #tpu.dimension_semantics<parallel>], iteration_bounds = array<i64: 2, 1, 1>, scalar_prefetch = 0 : i64, scratch_operands = 0 : i64, tpu.core_type = #tpu.core_type<tc>, window_params = [{transform_indices = @transform_0, window_bounds = array<i64: 1, 36, 128>}, {transform_indices = @transform_1, window_bounds = array<i64: 8, 36>}, {transform_indices = @transform_2, window_bounds = array<i64: 8, 1>}, {transform_indices = @transform_3, window_bounds = array<i64: 1, 8, 128>}]} {
    %c0 = arith.constant 0 : index
    %c0_0 = arith.constant 0 : index
    %0 = vector.load %arg4[%c0, %c0_0] : memref<8x36xbf16, #tpu.memory_space<vmem>>, vector<8x36xbf16>
    %c0_1 = arith.constant 0 : index
    %c0_2 = arith.constant 0 : index
    %c0_3 = arith.constant 0 : index
    %1 = vector.load %arg3[%c0_1, %c0_2, %c0_3] : memref<1x36x128xbf16, #tpu.memory_space<vmem>>, vector<1x36x128xbf16>
    %2 = vector.shape_cast %1 : vector<1x36x128xbf16> to vector<36x128xbf16>
    %cst = arith.constant dense<0.000000e+00> : vector<8x128xf32>
    %3 = tpu.matmul %0, %2, %cst {dimension_numbers = #tpu.dot_dimension_numbers<[1], [0], [0], [1], [0, 0, 1, 1], [], []>} : vector<8x36xbf16>, vector<36x128xbf16>, vector<8x128xf32> -> vector<8x128xf32>
    %c0_4 = arith.constant 0 : index
    %c0_5 = arith.constant 0 : index
    %4 = vector.load %arg5[%c0_4, %c0_5] : memref<8x1xf32, #tpu.memory_space<vmem>>, vector<8x1xf32>
    %5 = vector.broadcast %4 : vector<8x1xf32> to vector<8x128xf32>
    %6 = arith.addf %3, %5 : vector<8x128xf32>
    %c0_6 = arith.constant 0 : index
    %c0_7 = arith.constant 0 : index
    %c0_8 = arith.constant 0 : index
    %7 = vector.load %arg6[%c0_6, %c0_7, %c0_8] : memref<1x8x128xf32, #tpu.memory_space<vmem>>, vector<1x8x128xf32>
    %8 = vector.shape_cast %7 : vector<1x8x128xf32> to vector<8x128xf32>
    %9 = vector.shape_cast %6 : vector<8x128xf32> to vector<1x8x128xf32>
    tpu.vector_store %arg6[%c0_6, %c0_7, %c0_8], %9 {strides = array<i32>} : memref<1x8x128xf32, #tpu.memory_space<vmem>>, vector<1x8x128xf32>,
    return
  }
  func.func @transform_0(%arg0: i32, %arg1: i32, %arg2: i32) -> (i32, i32, i32) {
    %c0_i32 = arith.constant 0 : i32
    %c0_i32_0 = arith.constant 0 : i32
    return %arg0, %c0_i32, %arg2 : i32, i32, i32
  }
  func.func @transform_1(%arg0: i32, %arg1: i32, %arg2: i32) -> (i32, i32) {
    %c0_i32 = arith.constant 0 : i32
    %c0_i32_0 = arith.constant 0 : i32
    return %arg1, %c0_i32 : i32, i32
  }
  func.func @transform_2(%arg0: i32, %arg1: i32, %arg2: i32) -> (i32, i32) {
    %c0_i32 = arith.constant 0 : i32
    %c0_i32_0 = arith.constant 0 : i32
    return %arg1, %c0_i32 : i32, i32
  }
  func.func @transform_3(%arg0: i32, %arg1: i32, %arg2: i32) -> (i32, i32, i32) {
    %c0_i32 = arith.constant 0 : i32
    return %arg0, %arg1, %arg2 : i32, i32, i32
  }
}

</mosaic_0001>

<llo_original>
// kernel: tpu_custom_call.1
$region0: #{tpu_custom_call.1}
  #allocation0 [shape = 'u32[]', space=smem, size = 0x4, offset = 0x4, fixed_abs, tag = 'smem constant byte address 0x4 - core index']
  #allocation1 [shape = 'u32[144,128]{1,0:T(1,128)}', space=vmem, size = 0x12000, scoped, tag = 'internal scratch']
  %s0 = inlined_call_operand.vmem [shape: bf16[2,36,128], index: 0, kind: input, shape index: {}]
  %s1 = inlined_call_operand.vmem [shape: bf16[8,36], index: 1, kind: input, shape index: {}]
  %s2 = inlined_call_operand.vmem [shape: f32[8,1], index: 2, kind: input, shape index: {}]
  %s3 = inlined_call_operand.hbm [shape: f32[2,8,128], index: 3, kind: output, shape index: {}]
  %s4 = sld [smem:[#allocation0]]
  $region45: #{tpu_custom_call.1} parent=0
    _
  %s6 = ssub.s32 1, %s4
  %s7 = scalar_select 0, %s6, %s4
  $region1: #{tpu_custom_call.1} parent=0
    #allocation2 [shape = 'u8[8192]{0}', space=vmem, size = 0x2000, scoped, tag = 'output window, operand 0']
    #allocation3 [shape = 's32[2]{0}', space=sflag, size = 0x8, scoped, tag = 'scoped memory for tpu_custom_call.1']
    %8 = vsyncpa [#allocation3], 0
    %s9 = scalar_lea.sflag [#allocation3], 1
    %10 = vsyncpa %s9, 0
    loop: start=0, step=1, limit=4
    $region2: #{tpu_custom_call.1} parent=1 // loop_pre_header
      _
    $region3: #{tpu_custom_call.1} parent=1 // loop_header
      %s12 = sphi 0, %s16
      %p13 = scmp.ge.s32.totalorder %s12, 4
      %s19 = sphi 0, %s38
      %s20 = sphi 0, %s34
      %s21 = sphi 0, %s30
      %s22 = sphi 0, %s19
      %s23 = sphi 0, %s20
      %s24 = sphi 0, %s21
      %s25 = sphi 0, %s22
      %s26 = sphi 0, %s23
      %s27 = sphi 0, %s24
      %s43 = sphi 0, %s45
      %s46 = sphi 0, %s43
      %s47 = sphi 0, %s46
      %s63 = sphi 0, %s47
      %s69 = sphi 0, %s71
      %s72 = sphi 0, %s69
      %s73 = sphi 0, %s72
      %s89 = sphi 0, %s73
      %s95 = sphi 0, %s97
      %s98 = sphi 0, %s95
      %s99 = sphi 0, %s98
      %s115 = sphi 0, %s99
      %s125 = sphi 0, %s127
      %s128 = sphi 0, %s125
      %s129 = sphi 0, %s128
      %s145 = sphi 0, %s129
    $region4: #{tpu_custom_call.1} parent=1 // loop_header_branch
      %15 = sbr.rel (%p13) target = $region8
    $region5: #{tpu_custom_call.1} parent=1 // loop_body
      %s17 = ssub.s32 %s12, 1
      %s18 = ssub.s32 %s12, 2
      %s28 = sadd.s32 1, %s21
      %p29 = scmp.ge.s32.totalorder %s28, 1
      %s30 = scalar_select %p29, 0, %s28
      %s31 = sadd.s32 1, %s20
      %s32 = scalar_select %p29, %s31, %s20
      %p33 = scmp.ge.s32.totalorder %s32, 1
      %s34 = scalar_select %p33, 0, %s32
      %s35 = sadd.s32 1, %s19
      %s36 = scalar_select %p33, %s35, %s19
      %p37 = scmp.ge.s32.totalorder %s36, 2
      %s38 = scalar_select %p37, 0, %s36
      %s39 = ssub.s32 %s19, %s38
      %s40 = ssub.s32 %s21, %s30
      %s41 = sor.u32 %s39, %s40
      %p42 = scmp.eq.s32.totalorder %s41, 0
      %s44 = sadd.s32 %s43, 1
      %s45 = scalar_select %p42, %s43, %s44
      %p48 = pneg %p42
      %p49 = scmp.eq.s32.totalorder %s12, 1
      %p50 = por %p48, %p49
      %p51 = scmp.ne.s32.totalorder %s43, %s46
      %p52 = scmp.eq.s32.totalorder %s12, 0
      %p53 = por %p51, %p52
      %p54 = scmp.ne.s32.totalorder %s43, %s46
      %p55 = scmp.eq.s32.totalorder %s17, 1
      %p56 = por %p54, %p55
      %p57 = scmp.ne.s32.totalorder %s46, %s47
      %p58 = scmp.eq.s32.totalorder %s17, 0
      %p59 = por %p57, %p58
      %p60 = scmp.ne.s32.totalorder %s46, %s47
      %p61 = scmp.eq.s32.totalorder %s18, 1
      %p62 = por %p60, %p61
      %p64 = scmp.ne.s32.totalorder %s47, %s63
      %p65 = scmp.eq.s32.totalorder %s18, 0
      %p66 = por %p64, %p65
      %s67 = ssub.s32 %s20, %s34
      %p68 = scmp.eq.s32.totalorder %s67, 0
      %s70 = sadd.s32 %s69, 1
      %s71 = scalar_select %p68, %s69, %s70
      %p74 = pneg %p68
      %p75 = scmp.eq.s32.totalorder %s12, 1
      %p76 = por %p74, %p75
      %p77 = scmp.ne.s32.totalorder %s69, %s72
      %p78 = scmp.eq.s32.totalorder %s12, 0
      %p79 = por %p77, %p78
      %p80 = scmp.ne.s32.totalorder %s69, %s72
      %p81 = scmp.eq.s32.totalorder %s17, 1
      %p82 = por %p80, %p81
      %p83 = scmp.ne.s32.totalorder %s72, %s73
      %p84 = scmp.eq.s32.totalorder %s17, 0
      %p85 = por %p83, %p84
      %p86 = scmp.ne.s32.totalorder %s72, %s73
      %p87 = scmp.eq.s32.totalorder %s18, 1
      %p88 = por %p86, %p87
      %p90 = scmp.ne.s32.totalorder %s73, %s89
      %p91 = scmp.eq.s32.totalorder %s18, 0
      %p92 = por %p90, %p91
      %s93 = ssub.s32 %s20, %s34
      %p94 = scmp.eq.s32.totalorder %s93, 0
      %s96 = sadd.s32 %s95, 1
      %s97 = scalar_select %p94, %s95, %s96
      %p100 = pneg %p94
      %p101 = scmp.eq.s32.totalorder %s12, 1
      %p102 = por %p100, %p101
      %p103 = scmp.ne.s32.totalorder %s95, %s98
      %p104 = scmp.eq.s32.totalorder %s12, 0
      %p105 = por %p103, %p104
      %p106 = scmp.ne.s32.totalorder %s95, %s98
      %p107 = scmp.eq.s32.totalorder %s17, 1
      %p108 = por %p106, %p107
      %p109 = scmp.ne.s32.totalorder %s98, %s99
      %p110 = scmp.eq.s32.totalorder %s17, 0
      %p111 = por %p109, %p110
      %p112 = scmp.ne.s32.totalorder %s98, %s99
      %p113 = scmp.eq.s32.totalorder %s18, 1
      %p114 = por %p112, %p113
      %p116 = scmp.ne.s32.totalorder %s99, %s115
      %p117 = scmp.eq.s32.totalorder %s18, 0
      %p118 = por %p116, %p117
      %s119 = ssub.s32 %s19, %s38
      %s120 = ssub.s32 %s20, %s34
      %s121 = sor.u32 %s119, %s120
      %s122 = ssub.s32 %s21, %s30
      %s123 = sor.u32 %s121, %s122
      %p124 = scmp.eq.s32.totalorder %s123, 0
      %s126 = sadd.s32 %s125, 1
      %s127 = scalar_select %p124, %s125, %s126
      %p130 = pneg %p124
      %p131 = scmp.eq.s32.totalorder %s12, 1
      %p132 = por %p130, %p131
      %p133 = scmp.ne.s32.totalorder %s125, %s128
      %p134 = scmp.eq.s32.totalorder %s12, 0
      %p135 = por %p133, %p134
      %p136 = scmp.ne.s32.totalorder %s125, %s128
      %p137 = scmp.eq.s32.totalorder %s17, 1
      %p138 = por %p136, %p137
      %p139 = scmp.ne.s32.totalorder %s128, %s129
      %p140 = scmp.eq.s32.totalorder %s17, 0
      %p141 = por %p139, %p140
      %p142 = scmp.ne.s32.totalorder %s128, %s129
      %p143 = scmp.eq.s32.totalorder %s18, 1
      %p144 = por %p142, %p143
      %p146 = scmp.ne.s32.totalorder %s129, %s145
      %p147 = scmp.eq.s32.totalorder %s18, 0
      %p148 = por %p146, %p147
      %p149 = scmp.le.s32.totalorder 1, %s12
      %p150 = scmp.lt.s32.totalorder %s12, 3
      %p151 = pnand %p149, %p150
      %p152 = pneg %p151
      // Predicated region
      $region9: #{tpu_custom_call.1} parent=5 // pred_check
        _
      $region10: #{tpu_custom_call.1} parent=5 // pred_check_branch
        %154 = sbr.rel (%p151) target = $region12
      $region11: #{tpu_custom_call.1} parent=5 // pred_region
        %s155 = ssub.s32 %s12, 1
        // Predicated region
        $region13: #{tpu_custom_call.1} parent=11 // pred_check
          %p156 = pneg %p85
        $region14: #{tpu_custom_call.1} parent=11 // pred_check_branch
          %158 = sbr.rel (%p156) target = $region16
        $region15: #{tpu_custom_call.1} parent=11 // pred_region
          %p159 = scmp.lt.s32.totalorder %s23, 0
          %s160 = scalar_select %p159, %s23, 0
          %s161 = smul.addr %s160, 4
          %s162 = scalar_lea.vmem %s1, %s161
        $region16: #{tpu_custom_call.1} parent=11 // pred_fallthru
          _
        // Predicated region
        $region17: #{tpu_custom_call.1} parent=11 // pred_check
          %p163 = pneg %p111
        $region18: #{tpu_custom_call.1} parent=11 // pred_check_branch
          %165 = sbr.rel (%p163) target = $region20
        $region19: #{tpu_custom_call.1} parent=11 // pred_region
          %p166 = scmp.lt.s32.totalorder %s23, 0
          %s167 = scalar_select %p166, %s23, 0
          %s168 = smul.addr %s167, 8
          %s169 = scalar_lea.vmem %s2, %s168
        $region20: #{tpu_custom_call.1} parent=11 // pred_fallthru
          _
      $region12: #{tpu_custom_call.1} parent=5 // pred_fallthru
        _
      %p170 = scmp.lt.s32.totalorder %s12, 2
      // Predicated region
      $region21: #{tpu_custom_call.1} parent=5 // pred_check
        %p171 = pneg %p170
      $region22: #{tpu_custom_call.1} parent=5 // pred_check_branch
        %173 = sbr.rel (%p171) target = $region24
      $region23: #{tpu_custom_call.1} parent=5 // pred_region
        // Predicated region
        $region25: #{tpu_custom_call.1} parent=23 // pred_check
          %p174 = pneg %p53
        $region26: #{tpu_custom_call.1} parent=23 // pred_check_branch
          %176 = sbr.rel (%p174) target = $region28
        $region27: #{tpu_custom_call.1} parent=23 // pred_region
          %p177 = scmp.lt.s32.totalorder %s19, 1
          %s178 = scalar_select %p177, %s19, 1
          %p179 = scmp.lt.s32.totalorder %s21, 0
          %s180 = scalar_select %p179, %s21, 0
          %s181 = smul.addr %s178, 5
          %s182 = sadd.s32 %s180, %s181
          %s183 = smul.addr %s182, 4
          %s184 = scalar_lea.vmem %s0, %s183
        $region28: #{tpu_custom_call.1} parent=23 // pred_fallthru
          _
      $region24: #{tpu_custom_call.1} parent=5 // pred_fallthru
        _
      %p185 = scmp.le.s32.totalorder 1, %s12
      %p186 = scmp.lt.s32.totalorder %s12, 3
      %p187 = pnand %p185, %p186
      %p188 = pneg %p187
      // Predicated region
      $region29: #{tpu_custom_call.1} parent=5 // pred_check
        _
      $region30: #{tpu_custom_call.1} parent=5 // pred_check_branch
        %190 = sbr.rel (%p187) target = $region32
      $region31: #{tpu_custom_call.1} parent=5 // pred_region
        %s191 = ssub.s32 %s12, 1
        %p192 = scmp.lt.s32.totalorder %s22, 1
        %s193 = scalar_select %p192, %s22, 1
        %p194 = scmp.lt.s32.totalorder %s24, 0
        %s195 = scalar_select %p194, %s24, 0
        %s196 = smul.addr %s193, 5
        %s197 = sadd.s32 %s195, %s196
        %s198 = smul.addr %s197, 4
        %s199 = scalar_lea.vmem %s0, %s198
        %p200 = pneg %p59
        %p201 = pneg %p56
        %p202 = scmp.lt.s32.totalorder %s23, 0
        %s203 = scalar_select %p202, %s23, 0
        %s204 = smul.addr %s203, 4
        %s205 = scalar_lea.vmem %s1, %s204
        %p206 = pneg %p85
        %p207 = pneg %p82
        %p208 = scmp.lt.s32.totalorder %s23, 0
        %s209 = scalar_select %p208, %s23, 0
        %s210 = smul.addr %s209, 8
        %s211 = scalar_lea.vmem %s2, %s210
        %p212 = pneg %p111
        %p213 = pneg %p108
        %p214 = pneg %p141
        %p215 = pneg %p138
        %s216 = sand.u32 %s128, 1
        %s217 = scalar_lea.sflag [#allocation3], %s216
        %s218 = sand.u32 %s128, 1
        %s219 = smul.addr %s218, 8
        %s220 = scalar_lea.vmem [#allocation2], %s219
        %p221 = scmp.lt.s32.totalorder %s22, 1
        %s222 = scalar_select %p221, %s22, 1
        %p223 = scmp.lt.s32.totalorder %s24, 0
        %s224 = scalar_select %p223, %s24, 0
        %s225 = smul.addr %s222, 5
        %s226 = sadd.s32 %s224, %s225
        %s227 = smul.addr %s226, 4
        %s228 = scalar_lea.vmem %s0, %s227
        %p229 = scmp.lt.s32.totalorder %s23, 0
        %s230 = scalar_select %p229, %s23, 0
        %s231 = smul.addr %s230, 4
        %s232 = scalar_lea.vmem %s1, %s231
        %p233 = scmp.lt.s32.totalorder %s23, 0
        %s234 = scalar_select %p233, %s23, 0
        %s235 = smul.addr %s234, 8
        %s236 = scalar_lea.vmem %s2, %s235
        %v238 = vld [vmem:[%s232] sm:$0xf]
        %v239 = vld [vmem:[%s228] sm:$0xf]
        %v240 = vld [vmem:[%s228 + $0x4] sm:$0xf]
        %v241 = vld [vmem:[%s228 + $0x8] sm:$0xf]
        %v242 = vld [vmem:[%s228 + $0xc] sm:$0xf]
        %v243 = vld [vmem:[%s228 + $0x10] sm:$0x3]
        %v244 = vld [vmem:[%s236] sm:$0xff]
        %246 = vset.pattern.permute.xlu0 0
        %247 = vperm.xlu0 %246, %v244
        %v248 = vpop.permute.xlu0 %247
        %v255 = vunpack.c.l.b16 %v239
        %v256 = vunpack.c.l.b16 %v240
        %v257 = vunpack.c.l.b16 %v241
        %v258 = vunpack.c.l.b16 %v242
        %v259 = vunpack.c.l.b16 %v243
        %v260 = vpack.c.b16 %v256, %v255
        %v261 = vpack.c.b16 %v258, %v257
        %v262 = vpack.c.b16 %v259, %v259
        %vm265 = vcmask 293888
        %v267 = vsel %vm265, %v238, 0
        %vm269 = vcmask 1041408
        %v271 = vsel %vm269, %v262, 0
        %273 = vmatprep.subr.bf16.mxu0 0
        %274 = vmatpush1.bf16.msra.mxu0 %v260
        %275 = vmatprep.subr.bf16.mxu0 0
        %276 = vmatpush1.bf16.msra.mxu0 %v261
        %277 = vmatprep.subr.bf16.mxu0 0
        %278 = vmatpush1.bf16.msra.mxu0 %v271
        %279 = vmatprep.subr.bf16.mxu0 0
        %280 = vmatpush1.bf16.msra.mxu0 0
        %281 = vmatprep.subr.bf16.mxu0 0
        %282 = vmatpush1.bf16.msra.mxu0 0
        %283 = vmatprep.subr.bf16.mxu0 0
        %284 = vmatpush1.bf16.msra.mxu0 0
        %285 = vmatprep.subr.bf16.mxu0 0
        %286 = vmatpush1.bf16.msra.mxu0 0
        %287 = vmatprep.subr.bf16.mxu0 0
        %288 = vmatpush1.bf16.msra.mxu0 0
        %289 = vmatprep.subr.bf16.mxu0 0
        %290 = vmatpush1.bf16.msra.mxu0 0
        %291 = vmatprep.subr.bf16.mxu0 0
        %292 = vmatpush1.bf16.msra.mxu0 0
        %293 = vmatprep.subr.bf16.mxu0 0
        %294 = vmatpush1.bf16.msra.mxu0 0
        %295 = vmatprep.subr.bf16.mxu0 0
        %296 = vmatpush1.bf16.msra.mxu0 0
        %297 = vmatprep.subr.bf16.mxu0 0
        %298 = vmatpush1.bf16.msra.mxu0 0
        %299 = vmatprep.subr.bf16.mxu0 0
        %300 = vmatpush1.bf16.msra.mxu0 0
        %301 = vmatprep.subr.bf16.mxu0 0
        %302 = vmatpush1.bf16.msra.mxu0 0
        %303 = vmatprep.subr.bf16.mxu0 0
        %304 = vmatpush1.bf16.msra.mxu0 0
        %305 = vmatprep.mubr.bf16.mxu0 0
        %306 = vmatmul.mubr.bf16.gmra.mrb[0].mxu0 %v267
        %v307 = vpop.f32.mrb[0].mxu0
        %v308 = vadd.f32 %v248, %v307
        %v309 = vpop.f32.mrb[0].mxu0
        %v310 = vpop.f32.mrb[0].mxu0
        %v311 = vpop.f32.mrb[0].mxu0
        %312 = vdwg.mxu0
        %313 = vst [vmem:[%s220] sm:$0xff] %v308
        %s314 = sand.u32 %s128, 1
        %s315 = scalar_lea.sflag [#allocation3], %s314
        %s316 = sand.u32 %s128, 1
        %s317 = smul.addr %s316, 8
        %s318 = scalar_lea.vmem [#allocation2], %s317
        // Predicated region
        $region33: #{tpu_custom_call.1} parent=31 // pred_check
          %p319 = pneg %p138
        $region34: #{tpu_custom_call.1} parent=31 // pred_check_branch
          %321 = sbr.rel (%p319) target = $region36
        $region35: #{tpu_custom_call.1} parent=31 // pred_region
          %s323 = ssub.s32 128, 128
          %324 = vsyncadd %s315, %s323
          %s325 = sadd.s32 %s24, %s23
          %s326 = sadd.s32 %s325, %s22
          %s327 = smul.addr %s326, 128
          %s328 = scalar_lea.hbm %s3, %s327
          %s330 = sshll.u32 %s318, 4
          %s331 = int_to_ptr.vmem [resolvable:$true] %s330
          %333 = dma.vmem_to_hbm [thread:$0]  %s331, 128, %s328, %s315
        $region36: #{tpu_custom_call.1} parent=31 // pred_fallthru
          _
      $region32: #{tpu_custom_call.1} parent=5 // pred_fallthru
        _
      %p334 = scmp.le.s32.totalorder 2, %s12
      // Predicated region
      $region37: #{tpu_custom_call.1} parent=5 // pred_check
        %p335 = pneg %p334
      $region38: #{tpu_custom_call.1} parent=5 // pred_check_branch
        %337 = sbr.rel (%p335) target = $region40
      $region39: #{tpu_custom_call.1} parent=5 // pred_region
        %s338 = ssub.s32 %s12, 2
        // Predicated region
        $region41: #{tpu_custom_call.1} parent=39 // pred_check
          %p339 = pneg %p144
        $region42: #{tpu_custom_call.1} parent=39 // pred_check_branch
          %341 = sbr.rel (%p339) target = $region44
        $region43: #{tpu_custom_call.1} parent=39 // pred_region
          %s342 = sand.u32 %s129, 1
          %s343 = scalar_lea.sflag [#allocation3], %s342
          %s344 = sand.u32 %s129, 1
          %s345 = smul.addr %s344, 8
          %s346 = scalar_lea.vmem [#allocation2], %s345
          %347 = dma.done %s343, 128
        $region44: #{tpu_custom_call.1} parent=39 // pred_fallthru
          _
      $region40: #{tpu_custom_call.1} parent=5 // pred_fallthru
        _
    $region6: #{tpu_custom_call.1} parent=1 // loop_footer
      %s16 = sadd.s32 1, %s12
    $region7: #{tpu_custom_call.1} parent=1 // loop_footer_branch
      %11 = sbr.rel target = $region3
    $region8: #{tpu_custom_call.1} parent=1 // loop_exit
      _
    %348 = vsyncpa [#allocation3], 1
    %s349 = scalar_lea.sflag [#allocation3], 1
    %350 = vsyncpa %s349, 1

</llo_original>
